<compile_context>
chip_gen: v6e
topology: v6e:2x2x1
jax: 0.10.0
libtpu: 0.0.40
codegen_flags: <defaults>
</compile_context>

<pallas_src>
import functools

import jax
import jax.numpy as jnp
from jax import lax
from jax.experimental import pallas as pl
from jax.experimental.pallas import tpu as pltpu


def _round_up(x, m):
    return ((x + m - 1) // m) * m


# ----------------------------- Pallas kernel --------------------------------

def _fused_kernel(x_ref, we_ref, be_ref, wd_ref, bd_ref, o_ref):
    # x_ref : (1, F, tT) f32      we_ref : (F, D)  bf16    be_ref : (1, D)  f32
    # wd_ref: (D, Vp)    bf16     bd_ref : (1, Vp) f32 (padded lanes = -1e30)
    # o_ref : (1, tT, Vp)
    xb = x_ref[0].astype(jnp.bfloat16)                        # (F, tT) bf16

    # Encoder: contract F on the LHS axis 0 (transposed feed handled by the
    # MXU), bf16 inputs with f32 accumulation; bias + ReLU in f32.
    h = lax.dot_general(xb, we_ref[...],
                        dimension_numbers=(((0,), (0,)), ((), ())),
                        preferred_element_type=jnp.float32)   # (tT, D) f32
    h = jnp.maximum(h + be_ref[...], 0.0)

    # Decoder: bf16 MXU matmul, f32 accumulation.  Padded vocab lanes compute
    # h @ 0 + (-1e30) == -1e30, so no explicit masking is needed.
    logits = jnp.dot(h.astype(jnp.bfloat16), wd_ref[...],
                     preferred_element_type=jnp.float32) + bd_ref[...]

    # Numerically stable log_softmax along the vocab (lane) axis, in f32.
    m = jnp.max(logits, axis=-1, keepdims=True)
    shifted = logits - m
    lse = jnp.log(jnp.sum(jnp.exp(shifted), axis=-1, keepdims=True))
    o_ref[0] = (shifted - lse).astype(o_ref.dtype)


# ------------------------------ Wrapper --------------------------------------

def conformer_encoder_decoder_forward(spectrogram, spectrogram_length, params,
                                      *, vocab, time_tile=None,
                                      out_dtype=jnp.float32):
    """
    spectrogram        : (B, n_mels, T) float32   (PyTorch NCT layout)
    spectrogram_length : (B,) int32
    returns {'log_probs': (B, T, vocab), 'log_probs_length': (B,)}
    """
    B, F, T = spectrogram.shape
    D = params["w_enc"].shape[1]
    Vp = params["w_dec"].shape[1]
    assert Vp % 128 == 0 and Vp >= vocab

    # --- VMEM budgeting -------------------------------------------------------
    try:
        vmem_cap = int(pltpu.get_tpu_info().vmem_capacity_bytes)
    except Exception:
        vmem_cap = 64 << 20            # v7x per-core VMEM (the smallest case)
    budget = min(int(vmem_cap * 0.6), 100 << 20)

    out_bytes = jnp.dtype(out_dtype).itemsize
    # Resident (single-buffered) weights + biases.
    weight_bytes = 2 * (F * D + D * Vp) + 4 * (D + Vp)
    # Per-output-row footprint: output tile (double-buffered) + f32
    # logits/shifted/exp temporaries + x tile (double-buffered) + h (+bf16 copy).
    row_bytes = (2 * out_bytes + 12) * Vp + 8 * F + 6 * D

    if time_tile is None:
        time_tile = 128
        for cand in (512, 256, 128):   # largest row tile that fits the budget
            if weight_bytes + cand * row_bytes <= budget:
                time_tile = cand
                break
    # Clamp for short utterances; multiples of 16 keep bf16 sublanes packed.
    tT = min(time_tile, _round_up(T, 16))
    T_pad = _round_up(T, tT)
    x = spectrogram
    if T_pad != T:
        x = jnp.pad(x, ((0, 0), (0, 0), (0, T_pad - T)))

    vmem_limit = min(max(weight_bytes + tT * row_bytes + (4 << 20), 32 << 20),
                     int(vmem_cap * 0.9))

    resident = dict(pipeline_mode=pl.Buffered(1))   # grid-invariant blocks
    grid = (B, T_pad // tT)
    # TODO(synk): when B == 1 and T fits a single tile, split the time tile in
    # two so both v7x TensorCores get a grid step.

    out = pl.pallas_call(
        _fused_kernel,
        out_shape=jax.ShapeDtypeStruct((B, T_pad, Vp), out_dtype),
        grid_spec=pltpu.PrefetchScalarGridSpec(
            num_scalar_prefetch=0,
            grid=grid,
            in_specs=[
                pl.BlockSpec((1, F, tT), lambda b, t: (b, 0, t)),   # spectrogram tile
                pl.BlockSpec((F, D), lambda b, t: (0, 0), **resident),   # enc weight
                pl.BlockSpec((1, D), lambda b, t: (0, 0), **resident),   # enc bias
                pl.BlockSpec((D, Vp), lambda b, t: (0, 0), **resident),  # dec weight
                pl.BlockSpec((1, Vp), lambda b, t: (0, 0), **resident),  # dec bias
            ],
            out_specs=pl.BlockSpec((1, tT, Vp), lambda b, t: (b, t, 0)),
        ),
        compiler_params=pltpu.CompilerParams(
            dimension_semantics=("parallel", "parallel"),
            vmem_limit_bytes=vmem_limit),
    )(x, params["w_enc"], params["b_enc"], params["w_dec"], params["b_dec"])

    # TODO(synk): downstream consumers that tolerate padded (~-inf) vocab lanes
    # should consume `out[:, :T]` directly and skip this non-128-wide slice
    # (it costs one extra HBM pass over the largest tensor).
    log_probs = out[:, :T, :vocab]
    return {
        "log_probs": log_probs,
        "log_probs_length": spectrogram_length,  # identity length transform
    }


# ------------------------------ Param init -----------------------------------

def init_params(key, n_mels, d_model, vocab):
    k1, k2, k3, k4 = jax.random.split(key, 4)
    v_pad = _round_up(vocab, 128)
    scale_e = 1.0 / jnp.sqrt(jnp.float32(n_mels))
    scale_d = 1.0 / jnp.sqrt(jnp.float32(d_model))
    w_enc = jax.random.normal(k1, (n_mels, d_model), jnp.float32) * scale_e
    b_enc = jax.random.normal(k2, (1, d_model), jnp.float32) * 0.01
    w_dec = jax.random.normal(k3, (d_model, vocab), jnp.float32) * scale_d
    b_dec = jax.random.normal(k4, (1, vocab), jnp.float32) * 0.01
    # Pad the vocab axis to a multiple of 128 for lane-dense stores.  Weight
    # pad columns are 0; bias pad lanes are -1e30 so padded logits come out as
    # -1e30 with no in-kernel masking (h >= 0 after ReLU).
    w_dec = jnp.pad(w_dec, ((0, 0), (0, v_pad - vocab)))
    b_dec = jnp.pad(b_dec, ((0, 0), (0, v_pad - vocab)), constant_values=-1e30)
    return {
        "w_enc": w_enc.astype(jnp.bfloat16),   # bf16 weights for the MXU
        "b_enc": b_enc,                         # biases stay f32
        "w_dec": w_dec.astype(jnp.bfloat16),
        "b_dec": b_dec,
    }


# --------------------------------- Main ---------------------------------------

if __name__ == "__main__":
    B, n_mels, T = 2, 32, 16
    d_model, vocab = 128, 100          # vocab deliberately NOT a multiple of 128

    key = jax.random.PRNGKey(0)
    k_spec, k_params = jax.random.split(key)

    spectrogram = jax.random.normal(k_spec, (B, n_mels, T), jnp.float32)
    spectrogram_length = jnp.array([T, T - 4], dtype=jnp.int32)
    params = init_params(k_params, n_mels, d_model, vocab)

    fwd = jax.jit(functools.partial(conformer_encoder_decoder_forward, vocab=vocab))
    out = fwd(spectrogram, spectrogram_length, params)
    log_probs = jax.block_until_ready(out["log_probs"])
    lengths = jax.block_until_ready(out["log_probs_length"])

    # Shape / normalization sanity checks.
    assert log_probs.shape == (B, T, vocab)
    assert lengths.shape == (B,)
    row_sums = jnp.sum(jnp.exp(log_probs), axis=-1)
    assert bool(jnp.allclose(row_sums, 1.0, atol=1e-3))

    # Pure-JAX reference on the same bf16-rounded inputs (f32 math).
    x_ref = jnp.transpose(spectrogram, (0, 2, 1)).reshape(B * T, n_mels)
    x_ref = x_ref.astype(jnp.bfloat16).astype(jnp.float32)
    we = params["w_enc"].astype(jnp.float32)
    wd = params["w_dec"].astype(jnp.float32)[:, :vocab]
    h_ref = jnp.maximum(x_ref @ we + params["b_enc"], 0.0)
    h_ref = h_ref.astype(jnp.bfloat16).astype(jnp.float32)
    logits_ref = h_ref @ wd + params["b_dec"][:, :vocab]
    lp_ref = jax.nn.log_softmax(logits_ref, axis=-1).reshape(B, T, vocab)
    assert bool(jnp.allclose(log_probs, lp_ref, atol=2e-3, rtol=2e-3))

    print("KERNEL_OK")
</pallas_src>

<mosaic_0001>
module attributes {stable_mosaic.version = 11 : i64} {
  func.func @_fused_kernel(%arg0: i32, %arg1: i32, %arg2: memref<1x32x16xf32, #tpu.memory_space<vmem>>, %arg3: memref<32x128xbf16, #tpu.memory_space<vmem>>, %arg4: memref<1x128xf32, #tpu.memory_space<vmem>>, %arg5: memref<128x128xbf16, #tpu.memory_space<vmem>>, %arg6: memref<1x128xf32, #tpu.memory_space<vmem>>, %arg7: memref<1x16x128xf32, #tpu.memory_space<vmem>>) attributes {dimension_semantics = [#tpu.dimension_semantics<parallel>, #tpu.dimension_semantics<parallel>], iteration_bounds = array<i64: 2, 1>, scalar_prefetch = 0 : i64, scratch_operands = 0 : i64, tpu.core_type = #tpu.core_type<tc>, window_params = [{transform_indices = @transform_0, window_bounds = array<i64: 1, 32, 16>}, {pipeline_mode = #tpu.pipeline_mode<synchronous>, transform_indices = @transform_1, window_bounds = array<i64: 32, 128>}, {pipeline_mode = #tpu.pipeline_mode<synchronous>, transform_indices = @transform_2, window_bounds = array<i64: 1, 128>}, {pipeline_mode = #tpu.pipeline_mode<synchronous>, transform_indices = @transform_3, window_bounds = array<i64: 128, 128>}, {pipeline_mode = #tpu.pipeline_mode<synchronous>, transform_indices = @transform_4, window_bounds = array<i64: 1, 128>}, {transform_indices = @transform_5, window_bounds = array<i64: 1, 16, 128>}]} {
    %c0 = arith.constant 0 : index
    %c0_0 = arith.constant 0 : index
    %c0_1 = arith.constant 0 : index
    %0 = vector.load %arg2[%c0, %c0_0, %c0_1] : memref<1x32x16xf32, #tpu.memory_space<vmem>>, vector<1x32x16xf32>
    %1 = vector.shape_cast %0 : vector<1x32x16xf32> to vector<32x16xf32>
    %2 = arith.truncf %1 : vector<32x16xf32> to vector<32x16xbf16>
    %c0_2 = arith.constant 0 : index
    %c0_3 = arith.constant 0 : index
    %3 = vector.load %arg3[%c0_2, %c0_3] : memref<32x128xbf16, #tpu.memory_space<vmem>>, vector<32x128xbf16>
    %cst = arith.constant dense<0.000000e+00> : vector<16x128xf32>
    %4 = tpu.matmul %2, %3, %cst {dimension_numbers = #tpu.dot_dimension_numbers<[0], [0], [1], [1], [0, 1, 1, 1], [], []>} : vector<32x16xbf16>, vector<32x128xbf16>, vector<16x128xf32> -> vector<16x128xf32>
    %c0_4 = arith.constant 0 : index
    %c0_5 = arith.constant 0 : index
    %5 = vector.load %arg4[%c0_4, %c0_5] : memref<1x128xf32, #tpu.memory_space<vmem>>, vector<1x128xf32>
    %6 = vector.broadcast %5 : vector<1x128xf32> to vector<16x128xf32>
    %7 = arith.addf %4, %6 : vector<16x128xf32>
    %cst_6 = arith.constant 0.000000e+00 : f32
    %8 = vector.broadcast %cst_6 : f32 to vector<16x128xf32>
    %9 = arith.maximumf %7, %8 : vector<16x128xf32>
    %10 = arith.truncf %9 : vector<16x128xf32> to vector<16x128xbf16>
    %c0_7 = arith.constant 0 : index
    %c0_8 = arith.constant 0 : index
    %11 = vector.load %arg5[%c0_7, %c0_8] : memref<128x128xbf16, #tpu.memory_space<vmem>>, vector<128x128xbf16>
    %cst_9 = arith.constant dense<0.000000e+00> : vector<16x128xf32>
    %12 = tpu.matmul %10, %11, %cst_9 {dimension_numbers = #tpu.dot_dimension_numbers<[1], [0], [0], [1], [0, 0, 1, 1], [], []>} : vector<16x128xbf16>, vector<128x128xbf16>, vector<16x128xf32> -> vector<16x128xf32>
    %c0_10 = arith.constant 0 : index
    %c0_11 = arith.constant 0 : index
    %13 = vector.load %arg6[%c0_10, %c0_11] : memref<1x128xf32, #tpu.memory_space<vmem>>, vector<1x128xf32>
    %14 = vector.broadcast %13 : vector<1x128xf32> to vector<16x128xf32>
    %15 = arith.addf %12, %14 : vector<16x128xf32>
    %cst_12 = arith.constant dense<0xFF800000> : vector<16xf32>
    %16 = vector.multi_reduction <maximumf>, %15, %cst_12 [1] : vector<16x128xf32> to vector<16xf32>
    %17 = vector.shape_cast %16 : vector<16xf32> to vector<16x1xf32>
    %18 = vector.broadcast %17 : vector<16x1xf32> to vector<16x128xf32>
    %19 = arith.subf %15, %18 : vector<16x128xf32>
    %20 = math.exp %19 : vector<16x128xf32>
    %cst_13 = arith.constant dense<0.000000e+00> : vector<16xf32>
    %21 = vector.multi_reduction <add>, %20, %cst_13 [1] : vector<16x128xf32> to vector<16xf32>
    %22 = vector.shape_cast %21 : vector<16xf32> to vector<16x1xf32>
    %23 = math.log %22 : vector<16x1xf32>
    %24 = vector.broadcast %23 : vector<16x1xf32> to vector<16x128xf32>
    %25 = arith.subf %19, %24 : vector<16x128xf32>
    %c0_14 = arith.constant 0 : index
    %c0_15 = arith.constant 0 : index
    %c0_16 = arith.constant 0 : index
    %26 = vector.load %arg7[%c0_14, %c0_15, %c0_16] : memref<1x16x128xf32, #tpu.memory_space<vmem>>, vector<1x16x128xf32>
    %27 = vector.shape_cast %26 : vector<1x16x128xf32> to vector<16x128xf32>
    %28 = vector.shape_cast %25 : vector<16x128xf32> to vector<1x16x128xf32>
    tpu.vector_store %arg7[%c0_14, %c0_15, %c0_16], %28 {strides = array<i32>} : memref<1x16x128xf32, #tpu.memory_space<vmem>>, vector<1x16x128xf32>,
    return
  }
  func.func @transform_0(%arg0: i32, %arg1: i32) -> (i32, i32, i32) {
    %c0_i32 = arith.constant 0 : i32
    %c0_i32_0 = arith.constant 0 : i32
    return %arg0, %c0_i32, %arg1 : i32, i32, i32
  }
  func.func @transform_1(%arg0: i32, %arg1: i32) -> (i32, i32) {
    %c0_i32 = arith.constant 0 : i32
    %c0_i32_0 = arith.constant 0 : i32
    %c0_i32_1 = arith.constant 0 : i32
    return %c0_i32, %c0_i32_0 : i32, i32
  }
  func.func @transform_2(%arg0: i32, %arg1: i32) -> (i32, i32) {
    %c0_i32 = arith.constant 0 : i32
    %c0_i32_0 = arith.constant 0 : i32
    %c0_i32_1 = arith.constant 0 : i32
    return %c0_i32, %c0_i32_0 : i32, i32
  }
  func.func @transform_3(%arg0: i32, %arg1: i32) -> (i32, i32) {
    %c0_i32 = arith.constant 0 : i32
    %c0_i32_0 = arith.constant 0 : i32
    %c0_i32_1 = arith.constant 0 : i32
    return %c0_i32, %c0_i32_0 : i32, i32
  }
  func.func @transform_4(%arg0: i32, %arg1: i32) -> (i32, i32) {
    %c0_i32 = arith.constant 0 : i32
    %c0_i32_0 = arith.constant 0 : i32
    %c0_i32_1 = arith.constant 0 : i32
    return %c0_i32, %c0_i32_0 : i32, i32
  }
  func.func @transform_5(%arg0: i32, %arg1: i32) -> (i32, i32, i32) {
    %c0_i32 = arith.constant 0 : i32
    %c0_i32_0 = arith.constant 0 : i32
    return %arg0, %arg1, %c0_i32 : i32, i32, i32
  }
}

</mosaic_0001>

<llo_original>
// kernel: conformer_encoder_decoder_forward.1
$region0: #{conformer_encoder_decoder_forward.1}
  #allocation0 [shape = 'u32[]', space=smem, size = 0x4, offset = 0x4, fixed_abs, tag = 'smem constant byte address 0x4 - core index']
  #allocation1 [shape = 'u32[144,128]{1,0:T(1,128)}', space=vmem, size = 0x12000, scoped, tag = 'internal scratch']
  %s0 = inlined_call_operand.vmem [shape: f32[2,32,16], index: 0, kind: input, shape index: {}]
  %s1 = inlined_call_operand.vmem [shape: bf16[32,128], index: 1, kind: input, shape index: {}]
  %s2 = inlined_call_operand.vmem [shape: f32[1,128], index: 2, kind: input, shape index: {}]
  %s3 = inlined_call_operand.vmem [shape: bf16[128,128], index: 3, kind: input, shape index: {}]
  %s4 = inlined_call_operand.vmem [shape: f32[1,128], index: 4, kind: input, shape index: {}]
  %s5 = inlined_call_operand.hbm [shape: f32[2,16,128], index: 5, kind: output, shape index: {}]
  %s6 = sld [smem:[#allocation0]]
  $region53: #{conformer_encoder_decoder_forward.1} parent=0
    _
  %s8 = ssub.s32 1, %s6
  %s9 = scalar_select 0, %s8, %s6
  $region1: #{conformer_encoder_decoder_forward.1} parent=0
    #allocation2 [shape = 'u8[16384]{0}', space=vmem, size = 0x4000, scoped, tag = 'output window, operand 0']
    #allocation3 [shape = 's32[2]{0}', space=sflag, size = 0x8, scoped, tag = 'scoped memory for conformer_encoder_decoder_forward.1']
    %10 = vsyncpa [#allocation3], 0
    %s11 = scalar_lea.sflag [#allocation3], 1
    %12 = vsyncpa %s11, 0
    loop: start=0, step=1, limit=4
    $region2: #{conformer_encoder_decoder_forward.1} parent=1 // loop_pre_header
      _
    $region3: #{conformer_encoder_decoder_forward.1} parent=1 // loop_header
      %s14 = sphi 0, %s18
      %p15 = scmp.ge.s32.totalorder %s14, 4
      %s21 = sphi 0, %s33
      %s22 = sphi 0, %s29
      %s23 = sphi 0, %s21
      %s24 = sphi 0, %s22
      %s25 = sphi 0, %s23
      %s26 = sphi 0, %s24
      %s38 = sphi 0, %s40
      %s41 = sphi 0, %s38
      %s42 = sphi 0, %s41
      %s58 = sphi 0, %s42
      %s62 = sphi 0, %s62
      %s64 = sphi 0, %s62
      %s65 = sphi 0, %s64
      %s79 = sphi 0, %s65
      %s83 = sphi 0, %s83
      %s85 = sphi 0, %s83
      %s86 = sphi 0, %s85
      %s100 = sphi 0, %s86
      %s104 = sphi 0, %s104
      %s106 = sphi 0, %s104
      %s107 = sphi 0, %s106
      %s121 = sphi 0, %s107
      %s125 = sphi 0, %s125
      %s127 = sphi 0, %s125
      %s128 = sphi 0, %s127
      %s142 = sphi 0, %s128
      %s150 = sphi 0, %s152
      %s153 = sphi 0, %s150
      %s154 = sphi 0, %s153
      %s170 = sphi 0, %s154
    $region4: #{conformer_encoder_decoder_forward.1} parent=1 // loop_header_branch
      %17 = sbr.rel (%p15) target = $region8
    $region5: #{conformer_encoder_decoder_forward.1} parent=1 // loop_body
      %s19 = ssub.s32 %s14, 1
      %s20 = ssub.s32 %s14, 2
      %s27 = sadd.s32 1, %s22
      %p28 = scmp.ge.s32.totalorder %s27, 1
      %s29 = scalar_select %p28, 0, %s27
      %s30 = sadd.s32 1, %s21
      %s31 = scalar_select %p28, %s30, %s21
      %p32 = scmp.ge.s32.totalorder %s31, 2
      %s33 = scalar_select %p32, 0, %s31
      %s34 = ssub.s32 %s21, %s33
      %s35 = ssub.s32 %s22, %s29
      %s36 = sor.u32 %s34, %s35
      %p37 = scmp.eq.s32.totalorder %s36, 0
      %s39 = sadd.s32 %s38, 1
      %s40 = scalar_select %p37, %s38, %s39
      %p43 = pneg %p37
      %p44 = scmp.eq.s32.totalorder %s14, 1
      %p45 = por %p43, %p44
      %p46 = scmp.ne.s32.totalorder %s38, %s41
      %p47 = scmp.eq.s32.totalorder %s14, 0
      %p48 = por %p46, %p47
      %p49 = scmp.ne.s32.totalorder %s38, %s41
      %p50 = scmp.eq.s32.totalorder %s19, 1
      %p51 = por %p49, %p50
      %p52 = scmp.ne.s32.totalorder %s41, %s42
      %p53 = scmp.eq.s32.totalorder %s19, 0
      %p54 = por %p52, %p53
      %p55 = scmp.ne.s32.totalorder %s41, %s42
      %p56 = scmp.eq.s32.totalorder %s20, 1
      %p57 = por %p55, %p56
      %p59 = scmp.ne.s32.totalorder %s42, %s58
      %p60 = scmp.eq.s32.totalorder %s20, 0
      %p61 = por %p59, %p60
      %s63 = sadd.s32 %s62, 1
      %p66 = scmp.eq.s32.totalorder %s14, 1
      %p67 = scmp.ne.s32.totalorder %s62, %s64
      %p68 = scmp.eq.s32.totalorder %s14, 0
      %p69 = por %p67, %p68
      %p70 = scmp.ne.s32.totalorder %s62, %s64
      %p71 = scmp.eq.s32.totalorder %s19, 1
      %p72 = por %p70, %p71
      %p73 = scmp.ne.s32.totalorder %s64, %s65
      %p74 = scmp.eq.s32.totalorder %s19, 0
      %p75 = por %p73, %p74
      %p76 = scmp.ne.s32.totalorder %s64, %s65
      %p77 = scmp.eq.s32.totalorder %s20, 1
      %p78 = por %p76, %p77
      %p80 = scmp.ne.s32.totalorder %s65, %s79
      %p81 = scmp.eq.s32.totalorder %s20, 0
      %p82 = por %p80, %p81
      %s84 = sadd.s32 %s83, 1
      %p87 = scmp.eq.s32.totalorder %s14, 1
      %p88 = scmp.ne.s32.totalorder %s83, %s85
      %p89 = scmp.eq.s32.totalorder %s14, 0
      %p90 = por %p88, %p89
      %p91 = scmp.ne.s32.totalorder %s83, %s85
      %p92 = scmp.eq.s32.totalorder %s19, 1
      %p93 = por %p91, %p92
      %p94 = scmp.ne.s32.totalorder %s85, %s86
      %p95 = scmp.eq.s32.totalorder %s19, 0
      %p96 = por %p94, %p95
      %p97 = scmp.ne.s32.totalorder %s85, %s86
      %p98 = scmp.eq.s32.totalorder %s20, 1
      %p99 = por %p97, %p98
      %p101 = scmp.ne.s32.totalorder %s86, %s100
      %p102 = scmp.eq.s32.totalorder %s20, 0
      %p103 = por %p101, %p102
      %s105 = sadd.s32 %s104, 1
      %p108 = scmp.eq.s32.totalorder %s14, 1
      %p109 = scmp.ne.s32.totalorder %s104, %s106
      %p110 = scmp.eq.s32.totalorder %s14, 0
      %p111 = por %p109, %p110
      %p112 = scmp.ne.s32.totalorder %s104, %s106
      %p113 = scmp.eq.s32.totalorder %s19, 1
      %p114 = por %p112, %p113
      %p115 = scmp.ne.s32.totalorder %s106, %s107
      %p116 = scmp.eq.s32.totalorder %s19, 0
      %p117 = por %p115, %p116
      %p118 = scmp.ne.s32.totalorder %s106, %s107
      %p119 = scmp.eq.s32.totalorder %s20, 1
      %p120 = por %p118, %p119
      %p122 = scmp.ne.s32.totalorder %s107, %s121
      %p123 = scmp.eq.s32.totalorder %s20, 0
      %p124 = por %p122, %p123
      %s126 = sadd.s32 %s125, 1
      %p129 = scmp.eq.s32.totalorder %s14, 1
      %p130 = scmp.ne.s32.totalorder %s125, %s127
      %p131 = scmp.eq.s32.totalorder %s14, 0
      %p132 = por %p130, %p131
      %p133 = scmp.ne.s32.totalorder %s125, %s127
      %p134 = scmp.eq.s32.totalorder %s19, 1
      %p135 = por %p133, %p134
      %p136 = scmp.ne.s32.totalorder %s127, %s128
      %p137 = scmp.eq.s32.totalorder %s19, 0
      %p138 = por %p136, %p137
      %p139 = scmp.ne.s32.totalorder %s127, %s128
      %p140 = scmp.eq.s32.totalorder %s20, 1
      %p141 = por %p139, %p140
      %p143 = scmp.ne.s32.totalorder %s128, %s142
      %p144 = scmp.eq.s32.totalorder %s20, 0
      %p145 = por %p143, %p144
      %s146 = ssub.s32 %s21, %s33
      %s147 = ssub.s32 %s22, %s29
      %s148 = sor.u32 %s146, %s147
      %p149 = scmp.eq.s32.totalorder %s148, 0
      %s151 = sadd.s32 %s150, 1
      %s152 = scalar_select %p149, %s150, %s151
      %p155 = pneg %p149
      %p156 = scmp.eq.s32.totalorder %s14, 1
      %p157 = por %p155, %p156
      %p158 = scmp.ne.s32.totalorder %s150, %s153
      %p159 = scmp.eq.s32.totalorder %s14, 0
      %p160 = por %p158, %p159
      %p161 = scmp.ne.s32.totalorder %s150, %s153
      %p162 = scmp.eq.s32.totalorder %s19, 1
      %p163 = por %p161, %p162
      %p164 = scmp.ne.s32.totalorder %s153, %s154
      %p165 = scmp.eq.s32.totalorder %s19, 0
      %p166 = por %p164, %p165
      %p167 = scmp.ne.s32.totalorder %s153, %s154
      %p168 = scmp.eq.s32.totalorder %s20, 1
      %p169 = por %p167, %p168
      %p171 = scmp.ne.s32.totalorder %s154, %s170
      %p172 = scmp.eq.s32.totalorder %s20, 0
      %p173 = por %p171, %p172
      %p174 = scmp.le.s32.totalorder 1, %s14
      %p175 = scmp.lt.s32.totalorder %s14, 3
      %p176 = pnand %p174, %p175
      %p177 = pneg %p176
      // Predicated region
      $region9: #{conformer_encoder_decoder_forward.1} parent=5 // pred_check
        _
      $region10: #{conformer_encoder_decoder_forward.1} parent=5 // pred_check_branch
        %179 = sbr.rel (%p176) target = $region12
      $region11: #{conformer_encoder_decoder_forward.1} parent=5 // pred_region
        %s180 = ssub.s32 %s14, 1
        // Predicated region
        $region13: #{conformer_encoder_decoder_forward.1} parent=11 // pred_check
          %p181 = pneg %p75
        $region14: #{conformer_encoder_decoder_forward.1} parent=11 // pred_check_branch
          %183 = sbr.rel (%p181) target = $region16
        $region15: #{conformer_encoder_decoder_forward.1} parent=11 // pred_region
          _
        $region16: #{conformer_encoder_decoder_forward.1} parent=11 // pred_fallthru
          _
        // Predicated region
        $region17: #{conformer_encoder_decoder_forward.1} parent=11 // pred_check
          %p184 = pneg %p96
        $region18: #{conformer_encoder_decoder_forward.1} parent=11 // pred_check_branch
          %186 = sbr.rel (%p184) target = $region20
        $region19: #{conformer_encoder_decoder_forward.1} parent=11 // pred_region
          _
        $region20: #{conformer_encoder_decoder_forward.1} parent=11 // pred_fallthru
          _
        // Predicated region
        $region21: #{conformer_encoder_decoder_forward.1} parent=11 // pred_check
          %p187 = pneg %p117
        $region22: #{conformer_encoder_decoder_forward.1} parent=11 // pred_check_branch
          %189 = sbr.rel (%p187) target = $region24
        $region23: #{conformer_encoder_decoder_forward.1} parent=11 // pred_region
          _
        $region24: #{conformer_encoder_decoder_forward.1} parent=11 // pred_fallthru
          _
        // Predicated region
        $region25: #{conformer_encoder_decoder_forward.1} parent=11 // pred_check
          %p190 = pneg %p138
        $region26: #{conformer_encoder_decoder_forward.1} parent=11 // pred_check_branch
          %192 = sbr.rel (%p190) target = $region28
        $region27: #{conformer_encoder_decoder_forward.1} parent=11 // pred_region
          _
        $region28: #{conformer_encoder_decoder_forward.1} parent=11 // pred_fallthru
          _
      $region12: #{conformer_encoder_decoder_forward.1} parent=5 // pred_fallthru
        _
      %p193 = scmp.lt.s32.totalorder %s14, 2
      // Predicated region
      $region29: #{conformer_encoder_decoder_forward.1} parent=5 // pred_check
        %p194 = pneg %p193
      $region30: #{conformer_encoder_decoder_forward.1} parent=5 // pred_check_branch
        %196 = sbr.rel (%p194) target = $region32
      $region31: #{conformer_encoder_decoder_forward.1} parent=5 // pred_region
        // Predicated region
        $region33: #{conformer_encoder_decoder_forward.1} parent=31 // pred_check
          %p197 = pneg %p48
        $region34: #{conformer_encoder_decoder_forward.1} parent=31 // pred_check_branch
          %199 = sbr.rel (%p197) target = $region36
        $region35: #{conformer_encoder_decoder_forward.1} parent=31 // pred_region
          %p200 = scmp.lt.s32.totalorder %s21, 1
          %s201 = scalar_select %p200, %s21, 1
          %p202 = scmp.lt.s32.totalorder %s22, 0
          %s203 = scalar_select %p202, %s22, 0
          %s204 = smul.addr %s201, 4
          %s205 = sadd.s32 %s203, %s204
          %s206 = smul.addr %s205, 8
          %s207 = scalar_lea.vmem %s0, %s206
        $region36: #{conformer_encoder_decoder_forward.1} parent=31 // pred_fallthru
          _
      $region32: #{conformer_encoder_decoder_forward.1} parent=5 // pred_fallthru
        _
      %p208 = scmp.le.s32.totalorder 1, %s14
      %p209 = scmp.lt.s32.totalorder %s14, 3
      %p210 = pnand %p208, %p209
      %p211 = pneg %p210
      // Predicated region
      $region37: #{conformer_encoder_decoder_forward.1} parent=5 // pred_check
        _
      $region38: #{conformer_encoder_decoder_forward.1} parent=5 // pred_check_branch
        %213 = sbr.rel (%p210) target = $region40
      $region39: #{conformer_encoder_decoder_forward.1} parent=5 // pred_region
        %s214 = ssub.s32 %s14, 1
        %p215 = scmp.lt.s32.totalorder %s23, 1
        %s216 = scalar_select %p215, %s23, 1
        %p217 = scmp.lt.s32.totalorder %s24, 0
        %s218 = scalar_select %p217, %s24, 0
        %s219 = smul.addr %s216, 4
        %s220 = sadd.s32 %s218, %s219
        %s221 = smul.addr %s220, 8
        %s222 = scalar_lea.vmem %s0, %s221
        %p223 = pneg %p54
        %p224 = pneg %p51
        %p225 = pneg %p75
        %p226 = pneg %p72
        %p227 = pneg %p96
        %p228 = pneg %p93
        %p229 = pneg %p117
        %p230 = pneg %p114
        %p231 = pneg %p138
        %p232 = pneg %p135
        %p233 = pneg %p166
        %p234 = pneg %p163
        %s235 = sand.u32 %s153, 1
        %s236 = scalar_lea.sflag [#allocation3], %s235
        %s237 = sand.u32 %s153, 1
        %s238 = smul.addr %s237, 16
        %s239 = scalar_lea.vmem [#allocation2], %s238
        %p240 = scmp.lt.s32.totalorder %s23, 1
        %s241 = scalar_select %p240, %s23, 1
        %p242 = scmp.lt.s32.totalorder %s24, 0
        %s243 = scalar_select %p242, %s24, 0
        %s244 = smul.addr %s241, 4
        %s245 = sadd.s32 %s243, %s244
        %s246 = smul.addr %s245, 8
        %s247 = scalar_lea.vmem %s0, %s246
        %s248 = smul.u32 2, %s24
        %v250 = vld [vmem:[%s247] sm:$0xff]
        %v251 = vld [vmem:[%s247 + $0x8] sm:$0xff]
        %v252 = vld [vmem:[%s247 + $0x10] sm:$0xff]
        %v253 = vld [vmem:[%s247 + $0x18] sm:$0xff]
        %v254 = vpack.c.bf16 %v251, %v250
        %v255 = vpack.c.bf16 %v253, %v252
        %v256 = vld [vmem:[%s1] sm:$0xf]
        %v257 = vld [vmem:[%s1 + $0x4] sm:$0xf]
        %v258 = vld [vmem:[%s1 + $0x8] sm:$0xf]
        %v259 = vld [vmem:[%s1 + $0xc] sm:$0xf]
        %v260 = vld [vmem:[%s2] sm:$0x1]
        %v262 = vlaneseq
        %v263 = vshrl.u32 %v262, 7
        %v264 = vsub.s32 0, %v263
        %v265 = vrot.slane %v260, %v264
        %267 = vxpose.xlu0.c.b16.start [1/8] %v254, 128
        %268 = vxpose.xlu0.c.b16.cont [2/8] %v255, 128
        %269 = vxpose.xlu0.c.b16.cont [3/8] 0, 128
        %270 = vxpose.xlu0.c.b16.cont [4/8] 0, 128
        %271 = vxpose.xlu0.c.b16.cont [5/8] 0, 128
        %272 = vxpose.xlu0.c.b16.cont [6/8] 0, 128
        %273 = vxpose.xlu0.c.b16.cont [7/8] 0, 128
        %274 = vxpose.xlu0.c.b16.end [8/8] 0, 128
        %v275 = vpop.trf.xlu0
        %v276 = vpop.trf.xlu0
        %v277 = vpop.trf.xlu0
        %v278 = vpop.trf.xlu0
        %v279 = vpop.trf.xlu0
        %v280 = vpop.trf.xlu0
        %v281 = vpop.trf.xlu0
        %v282 = vpop.trf.xlu0
        %v287 = vunpack.c.l.b16 %v256
        %v288 = vunpack.c.l.b16 %v257
        %v289 = vunpack.c.l.b16 %v258
        %v290 = vunpack.c.l.b16 %v259
        %v291 = vpack.c.b16 %v288, %v287
        %v292 = vpack.c.b16 %v290, %v289
        %vm295 = vcmask 261120
        %v297 = vsel %vm295, %v275, 0
        %299 = vmatprep.subr.bf16.mxu0 0
        %300 = vmatpush1.bf16.msra.mxu0 0
        %301 = vmatprep.subr.bf16.mxu0 0
        %302 = vmatpush1.bf16.msra.mxu0 0
        %303 = vmatprep.subr.bf16.mxu0 0
        %304 = vmatpush1.bf16.msra.mxu0 0
        %305 = vmatprep.subr.bf16.mxu0 0
        %306 = vmatpush1.bf16.msra.mxu0 0
        %307 = vmatprep.subr.bf16.mxu0 0
        %308 = vmatpush1.bf16.msra.mxu0 0
        %309 = vmatprep.subr.bf16.mxu0 0
        %310 = vmatpush1.bf16.msra.mxu0 0
        %311 = vmatprep.subr.bf16.mxu0 0
        %312 = vmatpush1.bf16.msra.mxu0 %v292
        %313 = vmatprep.subr.bf16.mxu0 0
        %314 = vmatpush1.bf16.msra.mxu0 %v291
        %315 = vmatprep.subr.bf16.mxu0 0
        %316 = vmatpush2.bf16.msra.mxu0 0
        %317 = vmatprep.subr.bf16.mxu0 0
        %318 = vmatpush2.bf16.msra.mxu0 0
        %319 = vmatprep.subr.bf16.mxu0 0
        %320 = vmatpush2.bf16.msra.mxu0 0
        %321 = vmatprep.subr.bf16.mxu0 0
        %322 = vmatpush2.bf16.msra.mxu0 0
        %323 = vmatprep.subr.bf16.mxu0 0
        %324 = vmatpush2.bf16.msra.mxu0 0
        %325 = vmatprep.subr.bf16.mxu0 0
        %326 = vmatpush2.bf16.msra.mxu0 0
        %327 = vmatprep.subr.bf16.mxu0 0
        %328 = vmatpush2.bf16.msra.mxu0 0
        %329 = vmatprep.subr.bf16.mxu0 0
        %330 = vmatpush2.bf16.msra.mxu0 0
        %331 = vmatprep.mubr.bf16.mxu0 0
        %332 = vmatmul.mubr.bf16.gmra.mxu0 %v297
        %v333 = vpop.f32.mrf.mxu0
        %v334 = vadd.f32 %v265, %v333
        %v335 = vpop.f32.mrf.mxu0
        %v336 = vpop.f32.mrf.mxu0
        %v337 = vadd.f32 %v265, %v336
        %v338 = vpop.f32.mrf.mxu0
        %339 = vdwg.mxu0
        %v340 = vmax.f32 %v334, 0.0
        %v341 = vmax.f32 %v337, 0.0
        %v342 = vpack.c.bf16 %v341, %v340
        %v343 = vld [vmem:[%s3] sm:$0xf]
        %v344 = vld [vmem:[%s3 + $0x4] sm:$0xf]
        %v345 = vld [vmem:[%s3 + $0x8] sm:$0xf]
        %v346 = vld [vmem:[%s3 + $0xc] sm:$0xf]
        %v347 = vld [vmem:[%s3 + $0x10] sm:$0xf]
        %v348 = vld [vmem:[%s3 + $0x14] sm:$0xf]
        %v349 = vld [vmem:[%s3 + $0x18] sm:$0xf]
        %v350 = vld [vmem:[%s3 + $0x1c] sm:$0xf]
        %v351 = vld [vmem:[%s3 + $0x20] sm:$0xf]
        %v352 = vld [vmem:[%s3 + $0x24] sm:$0xf]
        %v353 = vld [vmem:[%s3 + $0x28] sm:$0xf]
        %v354 = vld [vmem:[%s3 + $0x2c] sm:$0xf]
        %v355 = vld [vmem:[%s3 + $0x30] sm:$0xf]
        %v356 = vld [vmem:[%s3 + $0x34] sm:$0xf]
        %v357 = vld [vmem:[%s3 + $0x38] sm:$0xf]
        %v358 = vld [vmem:[%s3 + $0x3c] sm:$0xf]
        %v359 = vld [vmem:[%s4] sm:$0x1]
        %v361 = vlaneseq
        %v362 = vshrl.u32 %v361, 7
        %v363 = vsub.s32 0, %v362
        %v364 = vrot.slane %v359, %v363
        %v382 = vunpack.c.l.b16 %v343
        %v383 = vunpack.c.l.b16 %v344
        %v384 = vunpack.c.l.b16 %v345
        %v385 = vunpack.c.l.b16 %v346
        %v386 = vunpack.c.l.b16 %v347
        %v387 = vunpack.c.l.b16 %v348
        %v388 = vunpack.c.l.b16 %v349
        %v389 = vunpack.c.l.b16 %v350
        %v390 = vunpack.c.l.b16 %v351
        %v391 = vunpack.c.l.b16 %v352
        %v392 = vunpack.c.l.b16 %v353
        %v393 = vunpack.c.l.b16 %v354
        %v394 = vunpack.c.l.b16 %v355
        %v395 = vunpack.c.l.b16 %v356
        %v396 = vunpack.c.l.b16 %v357
        %v397 = vunpack.c.l.b16 %v358
        %v398 = vpack.c.b16 %v383, %v382
        %v399 = vpack.c.b16 %v385, %v384
        %v400 = vpack.c.b16 %v387, %v386
        %v401 = vpack.c.b16 %v389, %v388
        %v402 = vpack.c.b16 %v391, %v390
        %v403 = vpack.c.b16 %v393, %v392
        %v404 = vpack.c.b16 %v395, %v394
        %v405 = vpack.c.b16 %v397, %v396
        %414 = vmatprep.subr.bf16.mxu0 0
        %415 = vmatpush1.bf16.msra.mxu0 %v405
        %416 = vmatprep.subr.bf16.mxu0 0
        %417 = vmatpush1.bf16.msra.mxu0 %v404
        %418 = vmatprep.subr.bf16.mxu0 0
        %419 = vmatpush1.bf16.msra.mxu0 %v403
        %420 = vmatprep.subr.bf16.mxu0 0
        %421 = vmatpush1.bf16.msra.mxu0 %v402
        %422 = vmatprep.subr.bf16.mxu0 0
        %423 = vmatpush1.bf16.msra.mxu0 %v401
        %424 = vmatprep.subr.bf16.mxu0 0
        %425 = vmatpush1.bf16.msra.mxu0 %v400
        %426 = vmatprep.subr.bf16.mxu0 0
        %427 = vmatpush1.bf16.msra.mxu0 %v399
        %428 = vmatprep.subr.bf16.mxu0 0
        %429 = vmatpush1.bf16.msra.mxu0 %v398
        %430 = vmatprep.subr.bf16.mxu0 0
        %431 = vmatpush2.bf16.msra.mxu0 0
        %432 = vmatprep.subr.bf16.mxu0 0
        %433 = vmatpush2.bf16.msra.mxu0 0
        %434 = vmatprep.subr.bf16.mxu0 0
        %435 = vmatpush2.bf16.msra.mxu0 0
        %436 = vmatprep.subr.bf16.mxu0 0
        %437 = vmatpush2.bf16.msra.mxu0 0
        %438 = vmatprep.subr.bf16.mxu0 0
        %439 = vmatpush2.bf16.msra.mxu0 0
        %440 = vmatprep.subr.bf16.mxu0 0
        %441 = vmatpush2.bf16.msra.mxu0 0
        %442 = vmatprep.subr.bf16.mxu0 0
        %443 = vmatpush2.bf16.msra.mxu0 0
        %444 = vmatprep.subr.bf16.mxu0 0
        %445 = vmatpush2.bf16.msra.mxu0 0
        %446 = vmatprep.mubr.bf16.mxu0 0
        %447 = vmatmul.mubr.bf16.gmra.mxu0 %v342
        %v448 = vpop.f32.mrf.mxu0
        %v449 = vadd.f32 %v364, %v448
        %v450 = vpop.f32.mrf.mxu0
        %v451 = vpop.f32.mrf.mxu0
        %v452 = vadd.f32 %v364, %v451
        %v453 = vpop.f32.mrf.mxu0
        %454 = vdwg.mxu0
        %455 = vmax.xlane.f32.xlu0 %v449
        %v456 = vpop.xlane.xlu0 %455
        %457 = vmax.xlane.f32.xlu0 %v452
        %v458 = vpop.xlane.xlu0 %457
        %v459 = vsub.f32 %v449, %v456
        %v460 = vsub.f32 %v452, %v458
        %v461 = vmul.f32 %v459, 1.442695
        %v462 = vpow.pop %v461
        %v463 = vmul.f32 %v460, 1.442695
        %v464 = vpow.pop %v463
        %465 = vadd.xlane.f32.xlu0 %v462
        %v466 = vpop.xlane.xlu0 %465
        %467 = vadd.xlane.f32.xlu0 %v464
        %v468 = vpop.xlane.xlu0 %467
        %v469 = vlog2.pop %v466
        %v470 = vmul.f32 %v469, 0.6931472
        %v471 = vlog2.pop %v468
        %v472 = vmul.f32 %v471, 0.6931472
        %v473 = vsub.f32 %v459, %v470
        %v474 = vsub.f32 %v460, %v472
        %475 = vst [vmem:[%s239] sm:$0xff] %v473
        %476 = vst [vmem:[%s239 + $0x8] sm:$0xff] %v474
        %s477 = sand.u32 %s153, 1
        %s478 = scalar_lea.sflag [#allocation3], %s477
        %s479 = sand.u32 %s153, 1
        %s480 = smul.addr %s479, 16
        %s481 = scalar_lea.vmem [#allocation2], %s480
        // Predicated region
        $region41: #{conformer_encoder_decoder_forward.1} parent=39 // pred_check
          %p482 = pneg %p163
        $region42: #{conformer_encoder_decoder_forward.1} parent=39 // pred_check_branch
          %484 = sbr.rel (%p482) target = $region44
        $region43: #{conformer_encoder_decoder_forward.1} parent=39 // pred_region
          %s485 = smul.u32 2, %s24
          %s487 = ssub.s32 256, 256
          %488 = vsyncadd %s478, %s487
          %s489 = smul.addr %s23, 2
          %s490 = sadd.s32 %s485, %s489
          %s491 = smul.addr %s490, 128
          %s492 = scalar_lea.hbm %s5, %s491
          %s493 = sshll.u32 %s481, 4
          %s494 = int_to_ptr.vmem [resolvable:$true] %s493
          %499 = dma.vmem_to_hbm [thread:$0]  %s494, 256, %s492, %s478, 128, 128, 8
        $region44: #{conformer_encoder_decoder_forward.1} parent=39 // pred_fallthru
          _
      $region40: #{conformer_encoder_decoder_forward.1} parent=5 // pred_fallthru
        _
      %p500 = scmp.le.s32.totalorder 2, %s14
      // Predicated region
      $region45: #{conformer_encoder_decoder_forward.1} parent=5 // pred_check
        %p501 = pneg %p500
      $region46: #{conformer_encoder_decoder_forward.1} parent=5 // pred_check_branch
        %503 = sbr.rel (%p501) target = $region48
      $region47: #{conformer_encoder_decoder_forward.1} parent=5 // pred_region
        %s504 = ssub.s32 %s14, 2
        // Predicated region
        $region49: #{conformer_encoder_decoder_forward.1} parent=47 // pred_check
          %p505 = pneg %p169
        $region50: #{conformer_encoder_decoder_forward.1} parent=47 // pred_check_branch
          %507 = sbr.rel (%p505) target = $region52
        $region51: #{conformer_encoder_decoder_forward.1} parent=47 // pred_region
          %s508 = sand.u32 %s154, 1
          %s509 = scalar_lea.sflag [#allocation3], %s508
          %s510 = sand.u32 %s154, 1
          %s511 = smul.addr %s510, 16
          %s512 = scalar_lea.vmem [#allocation2], %s511
          %513 = dma.done %s509, 256
        $region52: #{conformer_encoder_decoder_forward.1} parent=47 // pred_fallthru
          _
      $region48: #{conformer_encoder_decoder_forward.1} parent=5 // pred_fallthru
        _
    $region6: #{conformer_encoder_decoder_forward.1} parent=1 // loop_footer
      %s18 = sadd.s32 1, %s14
    $region7: #{conformer_encoder_decoder_forward.1} parent=1 // loop_footer_branch
      %13 = sbr.rel target = $region3
    $region8: #{conformer_encoder_decoder_forward.1} parent=1 // loop_exit
      _
    %514 = vsyncpa [#allocation3], 1
    %s515 = scalar_lea.sflag [#allocation3], 1
    %516 = vsyncpa %s515, 1

</llo_original>
